<compile_context>
chip_gen: v5e
topology: v5e:2x2
jax: 0.10.0
libtpu: 0.0.40
codegen_flags: <defaults>
</compile_context>

<pallas_src>
import jax
import jax.numpy as jnp
from jax.experimental import pallas as pl
from jax.experimental.pallas import tpu as pltpu


def _sigmoid_kernel(x_ref, o_ref):
    # sigmoid(x) = 1 / (1 + exp(-x)); exp lowers to the EUP.
    o_ref[...] = jax.nn.sigmoid(x_ref[...])


def sigmoid_pallas(x: jax.Array) -> jax.Array:
    """Elementwise sigmoid via a single gridless Pallas TPU call.

    The payload is presented as a (1, N) lane-major tile; full-array block shape,
    so no (8,128) padding is required and no host-side pad/slice copies are emitted.
    """
    orig_shape = x.shape
    n = x.size
    x2d = x.reshape(1, n)

    itemsize = jnp.dtype(x.dtype).itemsize
    out2d = pl.pallas_call(
        _sigmoid_kernel,
        out_shape=jax.ShapeDtypeStruct(x2d.shape, x2d.dtype),
        cost_estimate=pl.CostEstimate(
            flops=2 * n,
            transcendentals=n,
            bytes_accessed=2 * n * itemsize,
        ),
        compiler_params=pltpu.CompilerParams(allow_input_fusion=[True]),
    )(x2d)

    return out2d.reshape(orig_shape)


if __name__ == "__main__":
    key = jax.random.PRNGKey(0)
    # Same shape the module's forward consumes: [1, 864, 1, 1].
    x333 = jax.random.normal(key, (1, 864, 1, 1), dtype=jnp.float32)

    out = sigmoid_pallas(x333)
    jax.block_until_ready(out)

    # Sanity check against plain-JAX reference.
    ref = jax.nn.sigmoid(x333)
    assert out.shape == (1, 864, 1, 1)
    assert out.dtype == x333.dtype
    assert jnp.allclose(out, ref, atol=1e-6, rtol=1e-6)

    print("KERNEL_OK")
</pallas_src>

<mosaic_0001>
module attributes {stable_mosaic.version = 11 : i64} {
  func.func @_sigmoid_kernel(%arg0: memref<1x864xf32, #tpu.memory_space<vmem>>, %arg1: memref<1x864xf32, #tpu.memory_space<vmem>>) attributes {dimension_semantics = [], scalar_prefetch = 0 : i64, scratch_operands = 0 : i64, tpu.core_type = #tpu.core_type<tc>} {
    %c0 = arith.constant 0 : index
    %c0_0 = arith.constant 0 : index
    %0 = vector.load %arg0[%c0, %c0_0] : memref<1x864xf32, #tpu.memory_space<vmem>>, vector<1x864xf32>
    %1 = arith.negf %0 : vector<1x864xf32>
    %2 = math.exp %1 : vector<1x864xf32>
    %cst = arith.constant 1.000000e+00 : f32
    %3 = vector.broadcast %cst : f32 to vector<1x864xf32>
    %4 = arith.addf %3, %2 : vector<1x864xf32>
    %5 = arith.divf %3, %4 : vector<1x864xf32>
    %c0_1 = arith.constant 0 : index
    %c0_2 = arith.constant 0 : index
    %6 = vector.load %arg1[%c0_1, %c0_2] : memref<1x864xf32, #tpu.memory_space<vmem>>, vector<1x864xf32>
    tpu.vector_store %arg1[%c0_1, %c0_2], %5 {strides = array<i32>} : memref<1x864xf32, #tpu.memory_space<vmem>>, vector<1x864xf32>,
    return
  }
}

</mosaic_0001>

<llo_original>
// kernel: tpu_custom_call.1
$region0: #{tpu_custom_call.1}
  #allocation0 [shape = 'u32[]', space=smem, size = 0x4, offset = 0x4, fixed_abs, tag = 'smem constant byte address 0x4 - core index']
  #allocation1 [shape = 'u32[72,128]{1,0:T(1,128)}', space=vmem, size = 0x9000, scoped, tag = 'internal scratch']
  %s0 = inlined_call_operand.hbm [shape: f32[1,864], index: 0, kind: input, shape index: {}]
  %s1 = inlined_call_operand.hbm [shape: f32[1,864], index: 1, kind: output, shape index: {}]
  %s2 = sld [smem:[#allocation0]]
  $region18: #{tpu_custom_call.1} parent=0
    _
  %s4 = ssub.s32 1, %s2
  %s5 = scalar_select 0, %s4, %s2
  $region1: #{tpu_custom_call.1} parent=0
    #allocation2 [shape = 'u8[3584]{0}', space=vmem, size = 0x1000, scoped, tag = 'input window, operand 0, single buffered']
    #allocation3 [shape = 's32[1]{0}', space=sflag, size = 0x4, scoped, tag = 'scoped memory for tpu_custom_call.1']
    #allocation4 [shape = 's32[1]{0}', space=sflag, size = 0x4, scoped, tag = 'scoped memory for tpu_custom_call.1']
    #allocation5 [shape = 'u8[3584]{0}', space=vmem, size = 0x1000, scoped, tag = 'output window, operand 0, single buffered']
    %6 = vsyncpa [#allocation3], 0
    %7 = vsyncpa [#allocation4], 0
    // Predicated region
    $region2: #{tpu_custom_call.1} parent=1 // pred_check
      _
    $region3: #{tpu_custom_call.1} parent=1 // pred_check_branch
      %9 = sbr.rel (0) target = $region5
    $region4: #{tpu_custom_call.1} parent=1 // pred_region
      %11 = vsyncadd [#allocation3], 0
      %s13 = sshll.u32 %s0, 4
      %s14 = int_to_ptr.hbm [resolvable:$true] %s13
      %s15 = sshll.u32 [#allocation2], 4
      %s16 = int_to_ptr.vmem [resolvable:$true] %s15
      %18 = dma.hbm_to_vmem [thread:$0]  %s14, 112, %s16, [#allocation3]
    $region5: #{tpu_custom_call.1} parent=1 // pred_fallthru
      _
    // Predicated region
    $region6: #{tpu_custom_call.1} parent=1 // pred_check
      _
    $region7: #{tpu_custom_call.1} parent=1 // pred_check_branch
      %20 = sbr.rel (0) target = $region9
    $region8: #{tpu_custom_call.1} parent=1 // pred_region
      %22 = dma.done [#allocation3], 112
    $region9: #{tpu_custom_call.1} parent=1 // pred_fallthru
      _
    %v23 = vld [vmem:[#allocation2] sm:$0x7f]
    %v24 = vxor.u32 %v23, 2147483648
    %v25 = vmul.f32 %v24, 1.442695
    %v26 = vpow.pop %v25
    %v27 = vadd.f32 %v26, 1.0
    %v28 = vrcp.pop %v27
    %v29 = vmul.f32 %v27, %v28
    %v30 = vsub.f32 1.0, %v29
    %v31 = vmul.f32 %v28, %v30
    %v32 = vadd.f32 %v28, %v31
    %vm33 = vweird.f32 %v27
    %vm34 = vweird.f32 %v28
    %vm35 = vmor %vm33, %vm34
    %v36 = vsel %vm35, %v28, %v32
    %v37 = vand.u32 2147483647, %v27
    %vm38 = vcmp.eq.f32.partialorder %v37, 8.507059e+37
    %v39 = vand.u32 %v27, 2147483648
    %v40 = vor.u32 1.1754944e-38, %v39
    %v41 = vsel %vm38, %v40, %v36
    %v42 = vmul.f32 1.0, %v41
    %v43 = vlaneseq
    %vm44 = vcmp.ge.s32.totalorder %v43, 0
    %vm45 = vcmp.lt.s32.totalorder %v43, 864
    %vm46 = vmand %vm44, %vm45
    %47 = vst.msk [vmem:[#allocation5] sm:$0x7f] %vm46, %v42
    // Predicated region
    $region10: #{tpu_custom_call.1} parent=1 // pred_check
      _
    $region11: #{tpu_custom_call.1} parent=1 // pred_check_branch
      %49 = sbr.rel (0) target = $region13
    $region12: #{tpu_custom_call.1} parent=1 // pred_region
      %51 = vsyncadd [#allocation4], 0
      %s53 = sshll.u32 [#allocation5], 4
      %s54 = int_to_ptr.vmem [resolvable:$true] %s53
      %s55 = sshll.u32 %s1, 4
      %s56 = int_to_ptr.hbm [resolvable:$true] %s55
      %58 = dma.vmem_to_hbm [thread:$0]  %s54, 112, %s56, [#allocation4]
    $region13: #{tpu_custom_call.1} parent=1 // pred_fallthru
      _
    // Predicated region
    $region14: #{tpu_custom_call.1} parent=1 // pred_check
      _
    $region15: #{tpu_custom_call.1} parent=1 // pred_check_branch
      %60 = sbr.rel (0) target = $region17
    $region16: #{tpu_custom_call.1} parent=1 // pred_region
      %62 = dma.done [#allocation4], 112
    $region17: #{tpu_custom_call.1} parent=1 // pred_fallthru
      _
    %63 = vsyncpa [#allocation3], 1
    %64 = vsyncpa [#allocation4], 1

</llo_original>
